<compile_context>
chip_gen: v6e
topology: v6e:2x2x1
jax: 0.10.0
libtpu: 0.0.40
codegen_flags: <defaults>
</compile_context>

<pallas_src>
import functools

import numpy as np
import jax
import jax.numpy as jnp
from jax.experimental import pallas as pl
from jax.experimental.pallas import tpu as pltpu


def _round_up(a: int, b: int) -> int:
    return ((a + b - 1) // b) * b


def _stft_kernel(basis_ref, c0_ref, c1_ref, real_ref, imag_ref):
    """Computes one (freq, frame-tile) output tile.

    basis_ref: (2*Fp, n_fft) bf16  windowed real-DFT basis, (freq, sample)
    c0_ref   : (hop, TM)     bf16  chunk columns t in [i*TM, (i+1)*TM)
    c1_ref   : (hop, TM)     bf16  chunk columns t in [(i+1)*TM, (i+2)*TM)
    real_ref : (Fp, TM)      f32
    imag_ref : (Fp, TM)      f32
    """
    hop, tm = c0_ref.shape
    n_fft = basis_ref.shape[1]
    n_chunks = n_fft // hop
    fp = real_ref.shape[0]

    # Frame j of this tile (global frame i*TM + j) is the concatenation of
    # chunk columns (i*TM + j), ..., (i*TM + j + n_chunks - 1).  Assemble the
    # transposed frames (n_fft, TM) in VMEM from lane-shifted slices of the
    # two adjacent chunk blocks, then do one K=n_fft MXU matmul.
    cat = jnp.concatenate([c0_ref[...], c1_ref[...]], axis=1)          # (hop, 2*TM)
    frames_t = jnp.concatenate([cat[:, k:k + tm] for k in range(n_chunks)],
                               axis=0)                                  # (n_fft, TM)

    out = jnp.dot(basis_ref[...], frames_t,
                  preferred_element_type=jnp.float32)                   # (2*Fp, TM)
    real_ref[...] = out[:fp, :]
    imag_ref[...] = out[fp:, :]


def _pallas_stft(basis_t, chunks_t, *, fp, t_pad, tm):
    """basis_t: (2*Fp, n_fft) bf16; chunks_t: (BC, hop, n_rows) bf16.

    Returns (real, imag), each (BC, Fp, t_pad) f32, (freq, frame) oriented.
    """
    bc, hop, n_rows = chunks_t.shape
    two_fp, n_fft = basis_t.shape
    n_tiles = t_pad // tm
    assert n_rows >= t_pad + tm  # block i+1 must stay in bounds

    bf16, f32 = 2, 4
    need = (2 * two_fp * n_fft * bf16          # basis (worst case double buffered)
            + 2 * 2 * hop * tm * bf16          # two chunk input streams, 2 bufs each
            + 2 * 2 * fp * tm * f32            # two output streams, 2 bufs each
            + 2 * tm * hop * bf16              # in-kernel concat
            + n_fft * tm * bf16                # in-kernel frames_t
            + two_fp * tm * f32)               # matmul result
    vmem_limit = max(16 << 20, min(int(1.5 * need) + (4 << 20), 60 << 20))

    grid_spec = pltpu.PrefetchScalarGridSpec(
        num_scalar_prefetch=0,
        grid=(bc, n_tiles),
        in_specs=[
            pl.BlockSpec((two_fp, n_fft), lambda b, i: (0, 0)),      # basis (resident)
            pl.BlockSpec((None, hop, tm), lambda b, i: (b, 0, i)),   # chunk block i
            pl.BlockSpec((None, hop, tm), lambda b, i: (b, 0, i + 1)),  # lookahead blk
        ],
        out_specs=[
            pl.BlockSpec((None, fp, tm), lambda b, i: (b, 0, i)),
            pl.BlockSpec((None, fp, tm), lambda b, i: (b, 0, i)),
        ],
    )

    return pl.pallas_call(
        _stft_kernel,
        out_shape=(jax.ShapeDtypeStruct((bc, fp, t_pad), jnp.float32),
                   jax.ShapeDtypeStruct((bc, fp, t_pad), jnp.float32)),
        grid_spec=grid_spec,
        compiler_params=pltpu.CompilerParams(
            dimension_semantics=("parallel", "parallel"),
            vmem_limit_bytes=vmem_limit,
        ),
    )(basis_t, chunks_t, chunks_t)


class STFTWrapperPallas:
    """JAX/Pallas port of the PyTorch STFTWrapper forward pass."""

    def __init__(self, n_fft=1024, hop_length=256, win_length=None):
        self.n_fft = n_fft
        self.hop_length = hop_length
        self.win_length = win_length if win_length is not None else n_fft
        assert self.win_length <= self.n_fft
        # TODO(synk): support hop_length not dividing n_fft via gcd-sized chunks.
        assert self.n_fft % self.hop_length == 0, "hop_length must divide n_fft"

        # torch.hann_window default is periodic=True; torch.stft center-pads
        # a short window to n_fft.
        n = np.arange(self.win_length, dtype=np.float64)
        win = 0.5 - 0.5 * np.cos(2.0 * np.pi * n / self.win_length)
        if self.win_length < self.n_fft:
            left = (self.n_fft - self.win_length) // 2
            win = np.pad(win, (left, self.n_fft - self.win_length - left))
        self.window = jnp.asarray(win, dtype=jnp.float32)

        self.n_freq = self.n_fft // 2 + 1
        self.f_pad = _round_up(self.n_freq, 8)   # freq axis lives on sublanes

        # Transposed real-DFT basis with the window folded in.  Phase computed
        # with exact integer (n*f) mod n_fft and float64 trig, then bf16 cast.
        nn = np.arange(self.n_fft, dtype=np.int64)[None, :]
        ff = np.arange(self.n_freq, dtype=np.int64)[:, None]
        ang = 2.0 * np.pi * ((nn * ff) % self.n_fft).astype(np.float64) / self.n_fft
        cos_w = np.cos(ang) * win[None, :]                   # (F, n_fft)
        nsin_w = -np.sin(ang) * win[None, :]                  # (F, n_fft)
        basis_t = np.zeros((2 * self.f_pad, self.n_fft), dtype=np.float64)
        basis_t[:self.n_freq] = cos_w
        basis_t[self.f_pad:self.f_pad + self.n_freq] = nsin_w
        self.basis_t = jnp.asarray(basis_t, dtype=jnp.bfloat16)

    @functools.partial(jax.jit, static_argnums=0)
    def forward(self, x):
        do_reshape = x.ndim == 3
        if do_reshape:
            batch, chan, samp = x.shape
            x = x.reshape(batch * chan, samp)
        bc, samp = x.shape
        n_fft, hop = self.n_fft, self.hop_length
        nc = n_fft // hop

        # center=True -> reflect pad by n_fft//2 on both sides.
        pad = n_fft // 2
        x_pad = jnp.pad(x.astype(jnp.float32), ((0, 0), (pad, pad)),
                        mode="reflect")

        n_frames = samp // hop + 1

        # Frame-tile width: multiple of 128 lanes; prefer the largest tile
        # that does not increase the padded frame count.
        candidates = (512, 256, 128)
        t_pad = min(_round_up(n_frames, c) for c in candidates)
        tm = max(c for c in candidates if _round_up(n_frames, c) == t_pad)
        assert nc <= tm, "n_fft/hop must not exceed the frame tile"

        # Chunk the padded signal into hop-sized columns (no frame expansion).
        # n_rows covers block i+1 of the last tile plus all real data.
        n_rows = max(t_pad + tm, -(-(samp + n_fft) // hop))
        total = n_rows * hop
        x_pad = jnp.pad(x_pad, ((0, 0), (0, total - (samp + n_fft))))
        chunks_t = jnp.transpose(
            x_pad.astype(jnp.bfloat16).reshape(bc, n_rows, hop), (0, 2, 1))

        real, imag = _pallas_stft(self.basis_t, chunks_t,
                                  fp=self.f_pad, t_pad=t_pad, tm=tm)

        f, t = self.n_freq, n_frames
        # Single interleave pass to the torch.view_as_real layout (.., F, T, 2).
        X = jnp.stack([real[:, :f, :t], imag[:, :f, :t]], axis=-1)
        if do_reshape:
            X = X.reshape(batch, chan, f, t, 2)
        return X


def _reference_stft(x, n_fft, hop, window):
    """Pure-JAX reference (rfft) mimicking torch.stft(center=True, reflect)."""
    batch, chan, samp = x.shape
    xf = x.reshape(batch * chan, samp).astype(jnp.float32)
    pad = n_fft // 2
    xp = jnp.pad(xf, ((0, 0), (pad, pad)), mode="reflect")
    n_frames = samp // hop + 1
    idx = jnp.arange(n_frames)[:, None] * hop + jnp.arange(n_fft)[None, :]
    frames = xp[:, idx] * window[None, None, :]
    spec = jnp.fft.rfft(frames, axis=-1)            # (BC, T, F)
    X = jnp.stack([spec.real, spec.imag], axis=-1)  # (BC, T, F, 2)
    X = jnp.transpose(X, (0, 2, 1, 3))              # (BC, F, T, 2)
    return X.reshape(batch, chan, n_fft // 2 + 1, n_frames, 2).astype(jnp.float32)


if __name__ == "__main__":
    # Small shapes consistent with the module semantics.
    n_fft, hop = 128, 32
    batch, chan, samp = 2, 4, 512

    key = jax.random.PRNGKey(0)
    x = jax.random.normal(key, (batch, chan, samp), dtype=jnp.float32)

    stft = STFTWrapperPallas(n_fft=n_fft, hop_length=hop)
    X = jax.block_until_ready(stft.forward(x))

    # Shape matches torch.stft output (B, C, F, T, 2).
    expected_shape = (batch, chan, n_fft // 2 + 1, samp // hop + 1, 2)
    assert X.shape == expected_shape, (X.shape, expected_shape)

    # Numerical check vs. f32 rfft reference.  bf16 operands (f32 accumulate)
    # give ~0.3-0.5% relative error, well inside these tolerances.
    X_ref = _reference_stft(x, n_fft, hop, stft.window)
    max_err = float(jnp.max(jnp.abs(X - X_ref)))
    rel_fro = float(jnp.linalg.norm(X - X_ref) / jnp.linalg.norm(X_ref))
    assert jnp.allclose(X, X_ref, rtol=2e-2, atol=1e-1), (max_err, rel_fro)
    assert rel_fro < 5e-3, rel_fro

    print("KERNEL_OK")
</pallas_src>

<mosaic_0001>
module attributes {stable_mosaic.version = 11 : i64} {
  func.func @_stft_kernel(%arg0: i32, %arg1: i32, %arg2: memref<144x128xbf16, #tpu.memory_space<vmem>>, %arg3: memref<1x32x128xbf16, #tpu.memory_space<vmem>>, %arg4: memref<1x32x128xbf16, #tpu.memory_space<vmem>>, %arg5: memref<1x72x128xf32, #tpu.memory_space<vmem>>, %arg6: memref<1x72x128xf32, #tpu.memory_space<vmem>>) attributes {dimension_semantics = [#tpu.dimension_semantics<parallel>, #tpu.dimension_semantics<parallel>], iteration_bounds = array<i64: 8, 1>, scalar_prefetch = 0 : i64, scratch_operands = 0 : i64, tpu.core_type = #tpu.core_type<tc>, window_params = [{pipeline_mode = #tpu.pipeline_mode<synchronous>, transform_indices = @transform_0, window_bounds = array<i64: 144, 128>}, {transform_indices = @transform_1, window_bounds = array<i64: 1, 32, 128>}, {transform_indices = @transform_2, window_bounds = array<i64: 1, 32, 128>}, {transform_indices = @transform_3, window_bounds = array<i64: 1, 72, 128>}, {transform_indices = @transform_4, window_bounds = array<i64: 1, 72, 128>}]} {
    %c0 = arith.constant 0 : index
    %c0_0 = arith.constant 0 : index
    %c0_1 = arith.constant 0 : index
    %0 = vector.load %arg3[%c0, %c0_0, %c0_1] : memref<1x32x128xbf16, #tpu.memory_space<vmem>>, vector<1x32x128xbf16>
    %1 = vector.shape_cast %0 : vector<1x32x128xbf16> to vector<32x128xbf16>
    %c0_2 = arith.constant 0 : index
    %c0_3 = arith.constant 0 : index
    %c0_4 = arith.constant 0 : index
    %2 = vector.load %arg4[%c0_2, %c0_3, %c0_4] : memref<1x32x128xbf16, #tpu.memory_space<vmem>>, vector<1x32x128xbf16>
    %3 = vector.shape_cast %2 : vector<1x32x128xbf16> to vector<32x128xbf16>
    %4 = tpu.concatenate %1, %3 in 1 : vector<32x128xbf16>, vector<32x128xbf16> -> vector<32x256xbf16>
    %5 = vector.extract_strided_slice %4 {offsets = [0, 0], sizes = [32, 128], strides = [1, 1]} : vector<32x256xbf16> to vector<32x128xbf16>
    %6 = vector.extract_strided_slice %4 {offsets = [0, 1], sizes = [32, 128], strides = [1, 1]} : vector<32x256xbf16> to vector<32x128xbf16>
    %7 = vector.extract_strided_slice %4 {offsets = [0, 2], sizes = [32, 128], strides = [1, 1]} : vector<32x256xbf16> to vector<32x128xbf16>
    %8 = vector.extract_strided_slice %4 {offsets = [0, 3], sizes = [32, 128], strides = [1, 1]} : vector<32x256xbf16> to vector<32x128xbf16>
    %9 = tpu.concatenate %5, %6, %7, %8 in 0 : vector<32x128xbf16>, vector<32x128xbf16>, vector<32x128xbf16>, vector<32x128xbf16> -> vector<128x128xbf16>
    %c0_5 = arith.constant 0 : index
    %c0_6 = arith.constant 0 : index
    %10 = vector.load %arg2[%c0_5, %c0_6] : memref<144x128xbf16, #tpu.memory_space<vmem>>, vector<144x128xbf16>
    %cst = arith.constant dense<0.000000e+00> : vector<144x128xf32>
    %11 = tpu.matmul %10, %9, %cst {dimension_numbers = #tpu.dot_dimension_numbers<[1], [0], [0], [1], [0, 0, 1, 1], [], []>} : vector<144x128xbf16>, vector<128x128xbf16>, vector<144x128xf32> -> vector<144x128xf32>
    %12 = vector.extract_strided_slice %11 {offsets = [0, 0], sizes = [72, 128], strides = [1, 1]} : vector<144x128xf32> to vector<72x128xf32>
    %c0_7 = arith.constant 0 : index
    %c0_8 = arith.constant 0 : index
    %c0_9 = arith.constant 0 : index
    %13 = vector.load %arg5[%c0_7, %c0_8, %c0_9] : memref<1x72x128xf32, #tpu.memory_space<vmem>>, vector<1x72x128xf32>
    %14 = vector.shape_cast %13 : vector<1x72x128xf32> to vector<72x128xf32>
    %15 = vector.shape_cast %12 : vector<72x128xf32> to vector<1x72x128xf32>
    tpu.vector_store %arg5[%c0_7, %c0_8, %c0_9], %15 {strides = array<i32>} : memref<1x72x128xf32, #tpu.memory_space<vmem>>, vector<1x72x128xf32>,
    %16 = vector.extract_strided_slice %11 {offsets = [72, 0], sizes = [72, 128], strides = [1, 1]} : vector<144x128xf32> to vector<72x128xf32>
    %c0_10 = arith.constant 0 : index
    %c0_11 = arith.constant 0 : index
    %c0_12 = arith.constant 0 : index
    %17 = vector.load %arg6[%c0_10, %c0_11, %c0_12] : memref<1x72x128xf32, #tpu.memory_space<vmem>>, vector<1x72x128xf32>
    %18 = vector.shape_cast %17 : vector<1x72x128xf32> to vector<72x128xf32>
    %19 = vector.shape_cast %16 : vector<72x128xf32> to vector<1x72x128xf32>
    tpu.vector_store %arg6[%c0_10, %c0_11, %c0_12], %19 {strides = array<i32>} : memref<1x72x128xf32, #tpu.memory_space<vmem>>, vector<1x72x128xf32>,
    return
  }
  func.func @transform_0(%arg0: i32, %arg1: i32) -> (i32, i32) {
    %c0_i32 = arith.constant 0 : i32
    %c0_i32_0 = arith.constant 0 : i32
    %c0_i32_1 = arith.constant 0 : i32
    return %c0_i32, %c0_i32_0 : i32, i32
  }
  func.func @transform_1(%arg0: i32, %arg1: i32) -> (i32, i32, i32) {
    %c0_i32 = arith.constant 0 : i32
    %c0_i32_0 = arith.constant 0 : i32
    return %arg0, %c0_i32, %arg1 : i32, i32, i32
  }
  func.func @transform_2(%arg0: i32, %arg1: i32) -> (i32, i32, i32) {
    %c1_i32 = arith.constant 1 : i32
    %0 = arith.addi %arg1, %c1_i32 : i32
    %c0_i32 = arith.constant 0 : i32
    %c0_i32_0 = arith.constant 0 : i32
    return %arg0, %c0_i32, %0 : i32, i32, i32
  }
  func.func @transform_3(%arg0: i32, %arg1: i32) -> (i32, i32, i32) {
    %c0_i32 = arith.constant 0 : i32
    %c0_i32_0 = arith.constant 0 : i32
    return %arg0, %c0_i32, %arg1 : i32, i32, i32
  }
  func.func @transform_4(%arg0: i32, %arg1: i32) -> (i32, i32, i32) {
    %c0_i32 = arith.constant 0 : i32
    %c0_i32_0 = arith.constant 0 : i32
    return %arg0, %c0_i32, %arg1 : i32, i32, i32
  }
}

</mosaic_0001>

<llo_original>
// kernel: forward.1
$region0: #{forward.1}
  #allocation0 [shape = 'u32[]', space=smem, size = 0x4, offset = 0x4, fixed_abs, tag = 'smem constant byte address 0x4 - core index']
  #allocation1 [shape = 'u32[144,128]{1,0:T(1,128)}', space=vmem, size = 0x12000, scoped, tag = 'internal scratch']
  %s0 = inlined_call_operand.vmem [shape: bf16[144,128], index: 0, kind: input, shape index: {}]
  %s1 = inlined_call_operand.vmem [shape: bf16[8,32,256], index: 1, kind: input, shape index: {}, may-alias: {1,2}]
  %s2 = inlined_call_operand.vmem [shape: bf16[8,32,256], index: 2, kind: input, shape index: {}, may-alias: {1,2}]
  %s3 = inlined_call_operand.vmem [shape: f32[8,72,128], index: 3, kind: output, shape index: {0}]
  %s4 = inlined_call_operand.vmem [shape: f32[8,72,128], index: 4, kind: output, shape index: {1}]
  %5 = xla_tuple %s3, %s4
  %s6 = sld [smem:[#allocation0]]
  $region135: #{forward.1} parent=0
    _
  %s8 = ssub.s32 1, %s6
  %s9 = scalar_select 0, %s8, %s6
  $region1: #{forward.1} parent=0
    #allocation2 [shape = 'u8[16384]{0}', space=vmem, size = 0x4000, scoped, tag = 'input window, operand 1']
    #allocation3 [shape = 'u8[16384]{0}', space=vmem, size = 0x4000, scoped, tag = 'input window, operand 2']
    loop: start=0, step=1, limit=10
    $region2: #{forward.1} parent=1 // loop_pre_header
      _
    $region3: #{forward.1} parent=1 // loop_header
      %s11 = sphi 0, %s15
      %p12 = scmp.ge.s32.totalorder %s11, 10
      %s18 = sphi 0, %s30
      %s19 = sphi 0, %s26
      %s20 = sphi 0, %s18
      %s21 = sphi 0, %s19
      %s22 = sphi 0, %s20
      %s23 = sphi 0, %s21
      %s31 = sphi 0, %s31
      %s33 = sphi 0, %s31
      %s34 = sphi 0, %s33
      %s48 = sphi 0, %s34
      %s56 = sphi 0, %s58
      %s59 = sphi 0, %s56
      %s60 = sphi 0, %s59
      %s76 = sphi 0, %s60
      %s86 = sphi 0, %s88
      %s89 = sphi 0, %s86
      %s90 = sphi 0, %s89
      %s106 = sphi 0, %s90
      %s114 = sphi 0, %s116
      %s117 = sphi 0, %s114
      %s118 = sphi 0, %s117
      %s134 = sphi 0, %s118
      %s142 = sphi 0, %s144
      %s145 = sphi 0, %s142
      %s146 = sphi 0, %s145
      %s162 = sphi 0, %s146
    $region4: #{forward.1} parent=1 // loop_header_branch
      %14 = sbr.rel (%p12) target = $region8
    $region5: #{forward.1} parent=1 // loop_body
      %s16 = ssub.s32 %s11, 1
      %s17 = ssub.s32 %s11, 2
      %s24 = sadd.s32 1, %s19
      %p25 = scmp.ge.s32.totalorder %s24, 1
      %s26 = scalar_select %p25, 0, %s24
      %s27 = sadd.s32 1, %s18
      %s28 = scalar_select %p25, %s27, %s18
      %p29 = scmp.ge.s32.totalorder %s28, 8
      %s30 = scalar_select %p29, 0, %s28
      %s32 = sadd.s32 %s31, 1
      %p35 = scmp.eq.s32.totalorder %s11, 7
      %p36 = scmp.ne.s32.totalorder %s31, %s33
      %p37 = scmp.eq.s32.totalorder %s11, 0
      %p38 = por %p36, %p37
      %p39 = scmp.ne.s32.totalorder %s31, %s33
      %p40 = scmp.eq.s32.totalorder %s16, 7
      %p41 = por %p39, %p40
      %p42 = scmp.ne.s32.totalorder %s33, %s34
      %p43 = scmp.eq.s32.totalorder %s16, 0
      %p44 = por %p42, %p43
      %p45 = scmp.ne.s32.totalorder %s33, %s34
      %p46 = scmp.eq.s32.totalorder %s17, 7
      %p47 = por %p45, %p46
      %p49 = scmp.ne.s32.totalorder %s34, %s48
      %p50 = scmp.eq.s32.totalorder %s17, 0
      %p51 = por %p49, %p50
      %s52 = ssub.s32 %s18, %s30
      %s53 = ssub.s32 %s19, %s26
      %s54 = sor.u32 %s52, %s53
      %p55 = scmp.eq.s32.totalorder %s54, 0
      %s57 = sadd.s32 %s56, 1
      %s58 = scalar_select %p55, %s56, %s57
      %p61 = pneg %p55
      %p62 = scmp.eq.s32.totalorder %s11, 7
      %p63 = por %p61, %p62
      %p64 = scmp.ne.s32.totalorder %s56, %s59
      %p65 = scmp.eq.s32.totalorder %s11, 0
      %p66 = por %p64, %p65
      %p67 = scmp.ne.s32.totalorder %s56, %s59
      %p68 = scmp.eq.s32.totalorder %s16, 7
      %p69 = por %p67, %p68
      %p70 = scmp.ne.s32.totalorder %s59, %s60
      %p71 = scmp.eq.s32.totalorder %s16, 0
      %p72 = por %p70, %p71
      %p73 = scmp.ne.s32.totalorder %s59, %s60
      %p74 = scmp.eq.s32.totalorder %s17, 7
      %p75 = por %p73, %p74
      %p77 = scmp.ne.s32.totalorder %s60, %s76
      %p78 = scmp.eq.s32.totalorder %s17, 0
      %p79 = por %p77, %p78
      %s80 = sadd.s32 %s19, 1
      %s81 = sadd.s32 %s26, 1
      %s82 = ssub.s32 %s18, %s30
      %s83 = ssub.s32 %s80, %s81
      %s84 = sor.u32 %s82, %s83
      %p85 = scmp.eq.s32.totalorder %s84, 0
      %s87 = sadd.s32 %s86, 1
      %s88 = scalar_select %p85, %s86, %s87
      %p91 = pneg %p85
      %p92 = scmp.eq.s32.totalorder %s11, 7
      %p93 = por %p91, %p92
      %p94 = scmp.ne.s32.totalorder %s86, %s89
      %p95 = scmp.eq.s32.totalorder %s11, 0
      %p96 = por %p94, %p95
      %p97 = scmp.ne.s32.totalorder %s86, %s89
      %p98 = scmp.eq.s32.totalorder %s16, 7
      %p99 = por %p97, %p98
      %p100 = scmp.ne.s32.totalorder %s89, %s90
      %p101 = scmp.eq.s32.totalorder %s16, 0
      %p102 = por %p100, %p101
      %p103 = scmp.ne.s32.totalorder %s89, %s90
      %p104 = scmp.eq.s32.totalorder %s17, 7
      %p105 = por %p103, %p104
      %p107 = scmp.ne.s32.totalorder %s90, %s106
      %p108 = scmp.eq.s32.totalorder %s17, 0
      %p109 = por %p107, %p108
      %s110 = ssub.s32 %s18, %s30
      %s111 = ssub.s32 %s19, %s26
      %s112 = sor.u32 %s110, %s111
      %p113 = scmp.eq.s32.totalorder %s112, 0
      %s115 = sadd.s32 %s114, 1
      %s116 = scalar_select %p113, %s114, %s115
      %p119 = pneg %p113
      %p120 = scmp.eq.s32.totalorder %s11, 7
      %p121 = por %p119, %p120
      %p122 = scmp.ne.s32.totalorder %s114, %s117
      %p123 = scmp.eq.s32.totalorder %s11, 0
      %p124 = por %p122, %p123
      %p125 = scmp.ne.s32.totalorder %s114, %s117
      %p126 = scmp.eq.s32.totalorder %s16, 7
      %p127 = por %p125, %p126
      %p128 = scmp.ne.s32.totalorder %s117, %s118
      %p129 = scmp.eq.s32.totalorder %s16, 0
      %p130 = por %p128, %p129
      %p131 = scmp.ne.s32.totalorder %s117, %s118
      %p132 = scmp.eq.s32.totalorder %s17, 7
      %p133 = por %p131, %p132
      %p135 = scmp.ne.s32.totalorder %s118, %s134
      %p136 = scmp.eq.s32.totalorder %s17, 0
      %p137 = por %p135, %p136
      %s138 = ssub.s32 %s18, %s30
      %s139 = ssub.s32 %s19, %s26
      %s140 = sor.u32 %s138, %s139
      %p141 = scmp.eq.s32.totalorder %s140, 0
      %s143 = sadd.s32 %s142, 1
      %s144 = scalar_select %p141, %s142, %s143
      %p147 = pneg %p141
      %p148 = scmp.eq.s32.totalorder %s11, 7
      %p149 = por %p147, %p148
      %p150 = scmp.ne.s32.totalorder %s142, %s145
      %p151 = scmp.eq.s32.totalorder %s11, 0
      %p152 = por %p150, %p151
      %p153 = scmp.ne.s32.totalorder %s142, %s145
      %p154 = scmp.eq.s32.totalorder %s16, 7
      %p155 = por %p153, %p154
      %p156 = scmp.ne.s32.totalorder %s145, %s146
      %p157 = scmp.eq.s32.totalorder %s16, 0
      %p158 = por %p156, %p157
      %p159 = scmp.ne.s32.totalorder %s145, %s146
      %p160 = scmp.eq.s32.totalorder %s17, 7
      %p161 = por %p159, %p160
      %p163 = scmp.ne.s32.totalorder %s146, %s162
      %p164 = scmp.eq.s32.totalorder %s17, 0
      %p165 = por %p163, %p164
      %p166 = scmp.le.s32.totalorder 1, %s11
      %p167 = scmp.lt.s32.totalorder %s11, 9
      %p168 = pnand %p166, %p167
      %p169 = pneg %p168
      // Predicated region
      $region9: #{forward.1} parent=5 // pred_check
        _
      $region10: #{forward.1} parent=5 // pred_check_branch
        %171 = sbr.rel (%p168) target = $region12
      $region11: #{forward.1} parent=5 // pred_region
        %s172 = ssub.s32 %s11, 1
        // Predicated region
        $region13: #{forward.1} parent=11 // pred_check
          %p173 = pneg %p44
        $region14: #{forward.1} parent=11 // pred_check_branch
          %175 = sbr.rel (%p173) target = $region16
        $region15: #{forward.1} parent=11 // pred_region
          _
        $region16: #{forward.1} parent=11 // pred_fallthru
          _
      $region12: #{forward.1} parent=5 // pred_fallthru
        _
      %p176 = scmp.lt.s32.totalorder %s11, 8
      // Predicated region
      $region17: #{forward.1} parent=5 // pred_check
        %p177 = pneg %p176
      $region18: #{forward.1} parent=5 // pred_check_branch
        %179 = sbr.rel (%p177) target = $region20
      $region19: #{forward.1} parent=5 // pred_region
        // Predicated region
        $region21: #{forward.1} parent=19 // pred_check
          %p180 = pneg %p66
        $region22: #{forward.1} parent=19 // pred_check_branch
          %182 = sbr.rel (%p180) target = $region24
        $region23: #{forward.1} parent=19 // pred_region
          %s183 = sand.u32 %s56, 1
          %s184 = sand.u32 %s56, 1
          %s185 = smul.addr %s184, 16
          %s186 = scalar_lea.vmem [#allocation2], %s185
          %s187 = smul.addr %s18, 8
          %s188 = sadd.s32 %s19, %s187
          %s189 = smul.addr %s188, 4
          %s190 = scalar_lea.vmem %s1, %s189
          // Predicated region
          $region25: #{forward.1} parent=23 // pred_check
            _
          $region26: #{forward.1} parent=23 // pred_check_branch
            %192 = sbr.rel (0) target = $region28
          $region27: #{forward.1} parent=23 // pred_region
            // Predicated region
            $region29: #{forward.1} parent=27 // pred_check
              _
            $region30: #{forward.1} parent=27 // pred_check_branch
              %194 = sbr.rel target = $region32
            $region31: #{forward.1} parent=27 // pred_region
              // Predicated region
              $region44: #{forward.1} parent=31 // pred_check
                _
              $region45: #{forward.1} parent=31 // pred_check_branch
                %216 = sbr.rel (0) target = $region47
              $region46: #{forward.1} parent=31 // pred_region
                loop: start=0, step=1, limit=1
                $region48: #{forward.1} parent=46 // loop_pre_header
                  _
                $region49: #{forward.1} parent=46 // loop_header
                  %s218 = sphi 0, %s222
                  %p219 = scmp.ge.s32.totalorder %s218, 1
                  %s223 = sphi %s190, %s190
                  %s224 = sphi %s186, %s186
                $region50: #{forward.1} parent=46 // loop_header_branch
                  %221 = sbr.rel (%p219) target = $region54
                $region51: #{forward.1} parent=46 // loop_body
                  _
                $region52: #{forward.1} parent=46 // loop_footer
                  %s222 = sadd.s32 1, %s218
                $region53: #{forward.1} parent=46 // loop_footer_branch
                  %217 = sbr.rel target = $region49
                $region54: #{forward.1} parent=46 // loop_exit
                  _
                %s226 = ssub.s32 16, 1
                loop: start=0, step=1, limit=1
                $region55: #{forward.1} parent=46 // loop_pre_header
                  _
                $region56: #{forward.1} parent=46 // loop_header
                  %s228 = sphi 0, %s232
                  %p229 = scmp.ge.s32.totalorder %s228, 1
                  %s233 = sphi %s190, %s190
                  %s234 = sphi %s186, %s186
                $region57: #{forward.1} parent=46 // loop_header_branch
                  %231 = sbr.rel (%p229) target = $region61
                $region58: #{forward.1} parent=46 // loop_body
                  %v235 = vld [vmem:[%s233] sm:%s226]
                  %236 = vst [vmem:[%s234] sm:%s226] %v235
                  %v237 = vld [vmem:[%s233 + $0x8] sm:%s226]
                  %238 = vst [vmem:[%s234 + $0x4] sm:%s226] %v237
                  %v239 = vld [vmem:[%s233 + $0x10] sm:%s226]
                  %240 = vst [vmem:[%s234 + $0x8] sm:%s226] %v239
                  %v241 = vld [vmem:[%s233 + $0x18] sm:%s226]
                  %242 = vst [vmem:[%s234 + $0xc] sm:%s226] %v241
                $region59: #{forward.1} parent=46 // loop_footer
                  %s232 = sadd.s32 1, %s228
                $region60: #{forward.1} parent=46 // loop_footer_branch
                  %227 = sbr.rel target = $region56
                $region61: #{forward.1} parent=46 // loop_exit
                  _
              $region47: #{forward.1} parent=31 // pred_fallthru
                _
            $region32: #{forward.1} parent=27 // pred_fallthru
              _
            // Predicated region
            $region33: #{forward.1} parent=27 // pred_check
              _
            $region34: #{forward.1} parent=27 // pred_check_branch
              %196 = sbr.rel (0) target = $region36
            $region35: #{forward.1} parent=27 // pred_region
              %s198 = ssub.s32 16, 1
              loop: start=0, step=1, limit=1
              $region37: #{forward.1} parent=35 // loop_pre_header
                _
              $region38: #{forward.1} parent=35 // loop_header
                %s200 = sphi 0, %s204
                %p201 = scmp.ge.s32.totalorder %s200, 1
                %s205 = sphi %s190, %s190
                %s206 = sphi %s186, %s186
              $region39: #{forward.1} parent=35 // loop_header_branch
                %203 = sbr.rel (%p201) target = $region43
              $region40: #{forward.1} parent=35 // loop_body
                %v207 = vld [vmem:[%s205] sm:%s198]
                %208 = vst [vmem:[%s206] sm:%s198] %v207
                %v209 = vld [vmem:[%s205 + $0x8] sm:%s198]
                %210 = vst [vmem:[%s206 + $0x4] sm:%s198] %v209
                %v211 = vld [vmem:[%s205 + $0x10] sm:%s198]
                %212 = vst [vmem:[%s206 + $0x8] sm:%s198] %v211
                %v213 = vld [vmem:[%s205 + $0x18] sm:%s198]
                %214 = vst [vmem:[%s206 + $0xc] sm:%s198] %v213
              $region41: #{forward.1} parent=35 // loop_footer
                %s204 = sadd.s32 1, %s200
              $region42: #{forward.1} parent=35 // loop_footer_branch
                %199 = sbr.rel target = $region38
              $region43: #{forward.1} parent=35 // loop_exit
                _
            $region36: #{forward.1} parent=27 // pred_fallthru
              _
          $region28: #{forward.1} parent=23 // pred_fallthru
            _
          %243 = vnop
        $region24: #{forward.1} parent=19 // pred_fallthru
          _
        // Predicated region
        $region62: #{forward.1} parent=19 // pred_check
          %p244 = pneg %p96
        $region63: #{forward.1} parent=19 // pred_check_branch
          %246 = sbr.rel (%p244) target = $region65
        $region64: #{forward.1} parent=19 // pred_region
          %s247 = sand.u32 %s86, 1
          %s248 = sand.u32 %s86, 1
          %s249 = smul.addr %s248, 16
          %s250 = scalar_lea.vmem [#allocation3], %s249
          %s251 = sadd.s32 %s19, 1
          %s252 = smul.addr %s18, 8
          %s253 = sadd.s32 %s251, %s252
          %s254 = smul.addr %s253, 4
          %s255 = scalar_lea.vmem %s2, %s254
          // Predicated region
          $region66: #{forward.1} parent=64 // pred_check
            _
          $region67: #{forward.1} parent=64 // pred_check_branch
            %257 = sbr.rel (0) target = $region69
          $region68: #{forward.1} parent=64 // pred_region
            // Predicated region
            $region70: #{forward.1} parent=68 // pred_check
              _
            $region71: #{forward.1} parent=68 // pred_check_branch
              %259 = sbr.rel target = $region73
            $region72: #{forward.1} parent=68 // pred_region
              // Predicated region
              $region85: #{forward.1} parent=72 // pred_check
                _
              $region86: #{forward.1} parent=72 // pred_check_branch
                %281 = sbr.rel (0) target = $region88
              $region87: #{forward.1} parent=72 // pred_region
                loop: start=0, step=1, limit=1
                $region89: #{forward.1} parent=87 // loop_pre_header
                  _
                $region90: #{forward.1} parent=87 // loop_header
                  %s283 = sphi 0, %s287
                  %p284 = scmp.ge.s32.totalorder %s283, 1
                  %s288 = sphi %s255, %s255
                  %s289 = sphi %s250, %s250
                $region91: #{forward.1} parent=87 // loop_header_branch
                  %286 = sbr.rel (%p284) target = $region95
                $region92: #{forward.1} parent=87 // loop_body
                  _
                $region93: #{forward.1} parent=87 // loop_footer
                  %s287 = sadd.s32 1, %s283
                $region94: #{forward.1} parent=87 // loop_footer_branch
                  %282 = sbr.rel target = $region90
                $region95: #{forward.1} parent=87 // loop_exit
                  _
                %s291 = ssub.s32 16, 1
                loop: start=0, step=1, limit=1
                $region96: #{forward.1} parent=87 // loop_pre_header
                  _
                $region97: #{forward.1} parent=87 // loop_header
                  %s293 = sphi 0, %s297
                  %p294 = scmp.ge.s32.totalorder %s293, 1
                  %s298 = sphi %s255, %s255
                  %s299 = sphi %s250, %s250
                $region98: #{forward.1} parent=87 // loop_header_branch
                  %296 = sbr.rel (%p294) target = $region102
                $region99: #{forward.1} parent=87 // loop_body
                  %v300 = vld [vmem:[%s298] sm:%s291]
                  %301 = vst [vmem:[%s299] sm:%s291] %v300
                  %v302 = vld [vmem:[%s298 + $0x8] sm:%s291]
                  %303 = vst [vmem:[%s299 + $0x4] sm:%s291] %v302
                  %v304 = vld [vmem:[%s298 + $0x10] sm:%s291]
                  %305 = vst [vmem:[%s299 + $0x8] sm:%s291] %v304
                  %v306 = vld [vmem:[%s298 + $0x18] sm:%s291]
                  %307 = vst [vmem:[%s299 + $0xc] sm:%s291] %v306
                $region100: #{forward.1} parent=87 // loop_footer
                  %s297 = sadd.s32 1, %s293
                $region101: #{forward.1} parent=87 // loop_footer_branch
                  %292 = sbr.rel target = $region97
                $region102: #{forward.1} parent=87 // loop_exit
                  _
              $region88: #{forward.1} parent=72 // pred_fallthru
                _
            $region73: #{forward.1} parent=68 // pred_fallthru
              _
            // Predicated region
            $region74: #{forward.1} parent=68 // pred_check
              _
            $region75: #{forward.1} parent=68 // pred_check_branch
              %261 = sbr.rel (0) target = $region77
            $region76: #{forward.1} parent=68 // pred_region
              %s263 = ssub.s32 16, 1
              loop: start=0, step=1, limit=1
              $region78: #{forward.1} parent=76 // loop_pre_header
                _
              $region79: #{forward.1} parent=76 // loop_header
                %s265 = sphi 0, %s269
                %p266 = scmp.ge.s32.totalorder %s265, 1
                %s270 = sphi %s255, %s255
                %s271 = sphi %s250, %s250
              $region80: #{forward.1} parent=76 // loop_header_branch
                %268 = sbr.rel (%p266) target = $region84
              $region81: #{forward.1} parent=76 // loop_body
                %v272 = vld [vmem:[%s270] sm:%s263]
                %273 = vst [vmem:[%s271] sm:%s263] %v272
                %v274 = vld [vmem:[%s270 + $0x8] sm:%s263]
                %275 = vst [vmem:[%s271 + $0x4] sm:%s263] %v274
                %v276 = vld [vmem:[%s270 + $0x10] sm:%s263]
                %277 = vst [vmem:[%s271 + $0x8] sm:%s263] %v276
                %v278 = vld [vmem:[%s270 + $0x18] sm:%s263]
                %279 = vst [vmem:[%s271 + $0xc] sm:%s263] %v278
              $region82: #{forward.1} parent=76 // loop_footer
                %s269 = sadd.s32 1, %s265
              $region83: #{forward.1} parent=76 // loop_footer_branch
                %264 = sbr.rel target = $region79
              $region84: #{forward.1} parent=76 // loop_exit
                _
            $region77: #{forward.1} parent=68 // pred_fallthru
              _
          $region69: #{forward.1} parent=64 // pred_fallthru
            _
          %308 = vnop
        $region65: #{forward.1} parent=19 // pred_fallthru
          _
      $region20: #{forward.1} parent=5 // pred_fallthru
        _
      %p309 = scmp.le.s32.totalorder 1, %s11
      %p310 = scmp.lt.s32.totalorder %s11, 9
      %p311 = pnand %p309, %p310
      %p312 = pneg %p311
      // Predicated region
      $region103: #{forward.1} parent=5 // pred_check
        _
      $region104: #{forward.1} parent=5 // pred_check_branch
        %314 = sbr.rel (%p311) target = $region106
      $region105: #{forward.1} parent=5 // pred_region
        %s315 = ssub.s32 %s11, 1
        %s316 = sand.u32 %s59, 1
        %s317 = sand.u32 %s59, 1
        %s318 = smul.addr %s317, 16
        %s319 = scalar_lea.vmem [#allocation2], %s318
        // Predicated region
        $region107: #{forward.1} parent=105 // pred_check
          %p320 = pneg %p72
        $region108: #{forward.1} parent=105 // pred_check_branch
          %322 = sbr.rel (%p320) target = $region110
        $region109: #{forward.1} parent=105 // pred_region
          _
        $region110: #{forward.1} parent=105 // pred_fallthru
          _
        %s323 = sand.u32 %s89, 1
        %s324 = sand.u32 %s89, 1
        %s325 = smul.addr %s324, 16
        %s326 = scalar_lea.vmem [#allocation3], %s325
        // Predicated region
        $region111: #{forward.1} parent=105 // pred_check
          %p327 = pneg %p102
        $region112: #{forward.1} parent=105 // pred_check_branch
          %329 = sbr.rel (%p327) target = $region114
        $region113: #{forward.1} parent=105 // pred_region
          _
        $region114: #{forward.1} parent=105 // pred_fallthru
          _
        %p330 = pneg %p44
        %p331 = pneg %p41
        %s332 = sand.u32 %s59, 1
        %s333 = sand.u32 %s59, 1
        %s334 = smul.addr %s333, 16
        %s335 = scalar_lea.vmem [#allocation2], %s334
        %p336 = pneg %p72
        %p337 = pneg %p69
        %s338 = sand.u32 %s89, 1
        %s339 = sand.u32 %s89, 1
        %s340 = smul.addr %s339, 16
        %s341 = scalar_lea.vmem [#allocation3], %s340
        %p342 = pneg %p102
        %p343 = pneg %p99
        %p344 = pneg %p130
        %p345 = pneg %p127
        %p346 = scmp.lt.s32.totalorder %s20, 7
        %s347 = scalar_select %p346, %s20, 7
        %p348 = scmp.lt.s32.totalorder %s21, 0
        %s349 = scalar_select %p348, %s21, 0
        %s350 = smul.addr %s347, 9
        %s351 = sadd.s32 %s349, %s350
        %s352 = smul.addr %s351, 8
        %s353 = scalar_lea.vmem %s3, %s352
        %p354 = pneg %p158
        %p355 = pneg %p155
        %p356 = scmp.lt.s32.totalorder %s20, 7
        %s357 = scalar_select %p356, %s20, 7
        %p358 = scmp.lt.s32.totalorder %s21, 0
        %s359 = scalar_select %p358, %s21, 0
        %s360 = smul.addr %s357, 9
        %s361 = sadd.s32 %s359, %s360
        %s362 = smul.addr %s361, 8
        %s363 = scalar_lea.vmem %s4, %s362
        %s364 = sadd.s32 %s21, 1
        %p365 = scmp.lt.s32.totalorder %s20, 7
        %s366 = scalar_select %p365, %s20, 7
        %p367 = scmp.lt.s32.totalorder %s21, 0
        %s368 = scalar_select %p367, %s21, 0
        %s369 = smul.addr %s366, 9
        %s370 = sadd.s32 %s368, %s369
        %s371 = smul.addr %s370, 8
        %s372 = scalar_lea.vmem %s3, %s371
        %p373 = scmp.lt.s32.totalorder %s20, 7
        %s374 = scalar_select %p373, %s20, 7
        %p375 = scmp.lt.s32.totalorder %s21, 0
        %s376 = scalar_select %p375, %s21, 0
        %s377 = smul.addr %s374, 9
        %s378 = sadd.s32 %s376, %s377
        %s379 = smul.addr %s378, 8
        %s380 = scalar_lea.vmem %s4, %s379
        %v382 = vld [vmem:[%s319] sm:$0xf]
        %v383 = vld [vmem:[%s319 + $0x4] sm:$0xf]
        %v384 = vld [vmem:[%s319 + $0x8] sm:$0xf]
        %v385 = vld [vmem:[%s319 + $0xc] sm:$0xf]
        %v386 = vld [vmem:[%s326] sm:$0xf]
        %v387 = vld [vmem:[%s326 + $0x4] sm:$0xf]
        %v388 = vld [vmem:[%s326 + $0x8] sm:$0xf]
        %v389 = vld [vmem:[%s326 + $0xc] sm:$0xf]
        %v394 = vunpack.c.l.b16 %v382
        %v395 = vunpack.c.l.b16 %v383
        %v396 = vunpack.c.l.b16 %v384
        %v397 = vunpack.c.l.b16 %v385
        %v398 = vpack.c.b16 %v395, %v394
        %v399 = vpack.c.b16 %v397, %v396
        %v406 = vunpack.c.l.b16 %v386
        %v407 = vunpack.c.l.b16 %v387
        %v408 = vunpack.c.l.b16 %v388
        %v409 = vunpack.c.l.b16 %v389
        %v410 = vpack.c.b16 %v407, %v406
        %v411 = vpack.c.b16 %v409, %v408
        %412 = vrot.lane.b32.xlu0 %v398, 127
        %v413 = vpop.permute.xlu0 %412
        %414 = vrot.lane.b32.xlu0 %v410, 127
        %v415 = vpop.permute.xlu0 %414
        %416 = vrot.lane.b32.xlu0 %v399, 127
        %v417 = vpop.permute.xlu0 %416
        %418 = vrot.lane.b32.xlu0 %v411, 127
        %v419 = vpop.permute.xlu0 %418
        %vm420 = vcmask 1039360
        %v421 = vsel %vm420, %v413, %v415
        %v422 = vsel %vm420, %v417, %v419
        %425 = vrot.lane.b32.xlu0 %v398, 126
        %v426 = vpop.permute.xlu0 %425
        %427 = vrot.lane.b32.xlu0 %v410, 126
        %v428 = vpop.permute.xlu0 %427
        %429 = vrot.lane.b32.xlu0 %v399, 126
        %v430 = vpop.permute.xlu0 %429
        %431 = vrot.lane.b32.xlu0 %v411, 126
        %v432 = vpop.permute.xlu0 %431
        %vm433 = vcmask 1031168
        %v434 = vsel %vm433, %v426, %v428
        %v435 = vsel %vm433, %v430, %v432
        %438 = vrot.lane.b32.xlu0 %v398, 125
        %v439 = vpop.permute.xlu0 %438
        %440 = vrot.lane.b32.xlu0 %v410, 125
        %v441 = vpop.permute.xlu0 %440
        %442 = vrot.lane.b32.xlu0 %v399, 125
        %v443 = vpop.permute.xlu0 %442
        %444 = vrot.lane.b32.xlu0 %v411, 125
        %v445 = vpop.permute.xlu0 %444
        %vm446 = vcmask 1022976
        %v447 = vsel %vm446, %v439, %v441
        %v448 = vsel %vm446, %v443, %v445
        %v451 = vld [vmem:[%s0] sm:$0xf]
        %v452 = vld [vmem:[%s0 + $0x4] sm:$0xf]
        %v453 = vld [vmem:[%s0 + $0x8] sm:$0xf]
        %v454 = vld [vmem:[%s0 + $0xc] sm:$0xf]
        %v455 = vld [vmem:[%s0 + $0x10] sm:$0xf]
        %v456 = vld [vmem:[%s0 + $0x14] sm:$0xf]
        %v457 = vld [vmem:[%s0 + $0x18] sm:$0xf]
        %v458 = vld [vmem:[%s0 + $0x1c] sm:$0xf]
        %v459 = vld [vmem:[%s0 + $0x20] sm:$0xf]
        %v460 = vld [vmem:[%s0 + $0x24] sm:$0xf]
        %v461 = vld [vmem:[%s0 + $0x28] sm:$0xf]
        %v462 = vld [vmem:[%s0 + $0x2c] sm:$0xf]
        %v463 = vld [vmem:[%s0 + $0x30] sm:$0xf]
        %v464 = vld [vmem:[%s0 + $0x34] sm:$0xf]
        %v465 = vld [vmem:[%s0 + $0x38] sm:$0xf]
        %v466 = vld [vmem:[%s0 + $0x3c] sm:$0xf]
        %v467 = vld [vmem:[%s0 + $0x40] sm:$0xf]
        %v468 = vld [vmem:[%s0 + $0x44] sm:$0xf]
        %v487 = vunpack.c.l.b16 %v451
        %v488 = vunpack.c.l.b16 %v452
        %v489 = vunpack.c.l.b16 %v453
        %v490 = vunpack.c.l.b16 %v454
        %v491 = vunpack.c.l.b16 %v455
        %v492 = vunpack.c.l.b16 %v456
        %v493 = vunpack.c.l.b16 %v457
        %v494 = vunpack.c.l.b16 %v458
        %v495 = vunpack.c.l.b16 %v459
        %v496 = vunpack.c.l.b16 %v460
        %v497 = vunpack.c.l.b16 %v461
        %v498 = vunpack.c.l.b16 %v462
        %v499 = vunpack.c.l.b16 %v463
        %v500 = vunpack.c.l.b16 %v464
        %v501 = vunpack.c.l.b16 %v465
        %v502 = vunpack.c.l.b16 %v466
        %v503 = vunpack.c.l.b16 %v467
        %v504 = vunpack.c.l.b16 %v468
        %v505 = vpack.c.b16 %v488, %v487
        %v506 = vpack.c.b16 %v490, %v489
        %v507 = vpack.c.b16 %v492, %v491
        %v508 = vpack.c.b16 %v494, %v493
        %v509 = vpack.c.b16 %v496, %v495
        %v510 = vpack.c.b16 %v498, %v497
        %v511 = vpack.c.b16 %v500, %v499
        %v512 = vpack.c.b16 %v502, %v501
        %v513 = vpack.c.b16 %v504, %v503
        %523 = vmatprep.subr.bf16.mxu0 0
        %524 = vmatpush1.bf16.msra.mxu0 %v448
        %525 = vmatprep.subr.bf16.mxu0 0
        %526 = vmatpush1.bf16.msra.mxu0 %v447
        %527 = vmatprep.subr.bf16.mxu0 0
        %528 = vmatpush1.bf16.msra.mxu0 %v435
        %529 = vmatprep.subr.bf16.mxu0 0
        %530 = vmatpush1.bf16.msra.mxu0 %v434
        %531 = vmatprep.subr.bf16.mxu0 0
        %532 = vmatpush1.bf16.msra.mxu0 %v422
        %533 = vmatprep.subr.bf16.mxu0 0
        %534 = vmatpush1.bf16.msra.mxu0 %v421
        %535 = vmatprep.subr.bf16.mxu0 0
        %536 = vmatpush1.bf16.msra.mxu0 %v399
        %537 = vmatprep.subr.bf16.mxu0 0
        %538 = vmatpush1.bf16.msra.mxu0 %v398
        %539 = vmatprep.subr.bf16.mxu0 0
        %540 = vmatpush2.bf16.msra.mxu0 0
        %541 = vmatprep.subr.bf16.mxu0 0
        %542 = vmatpush2.bf16.msra.mxu0 0
        %543 = vmatprep.subr.bf16.mxu0 0
        %544 = vmatpush2.bf16.msra.mxu0 0
        %545 = vmatprep.subr.bf16.mxu0 0
        %546 = vmatpush2.bf16.msra.mxu0 0
        %547 = vmatprep.subr.bf16.mxu0 0
        %548 = vmatpush2.bf16.msra.mxu0 0
        %549 = vmatprep.subr.bf16.mxu0 0
        %550 = vmatpush2.bf16.msra.mxu0 0
        %551 = vmatprep.subr.bf16.mxu0 0
        %552 = vmatpush2.bf16.msra.mxu0 0
        %553 = vmatprep.subr.bf16.mxu0 0
        %554 = vmatpush2.bf16.msra.mxu0 0
        %555 = vmatprep.mubr.bf16.mxu0 0
        %556 = vmatmul.mubr.bf16.gmra.mxu0 %v505
        %v557 = vpop.f32.mrf.mxu0
        %v558 = vadd.f32 0.0, %v557
        %v559 = vpop.f32.mrf.mxu0
        %v560 = vpop.f32.mrf.mxu0
        %v561 = vadd.f32 0.0, %v560
        %v562 = vpop.f32.mrf.mxu0
        %563 = vmatprep.mubr.bf16.mxu0 0
        %564 = vmatmul.mubr.bf16.gmra.mxu0 %v506
        %v565 = vpop.f32.mrf.mxu0
        %v566 = vadd.f32 0.0, %v565
        %v567 = vpop.f32.mrf.mxu0
        %v568 = vpop.f32.mrf.mxu0
        %v569 = vadd.f32 0.0, %v568
        %v570 = vpop.f32.mrf.mxu0
        %571 = vmatprep.mubr.bf16.mxu0 0
        %572 = vmatmul.mubr.bf16.gmra.mxu0 %v507
        %v573 = vpop.f32.mrf.mxu0
        %v574 = vadd.f32 0.0, %v573
        %v575 = vpop.f32.mrf.mxu0
        %v576 = vpop.f32.mrf.mxu0
        %v577 = vadd.f32 0.0, %v576
        %v578 = vpop.f32.mrf.mxu0
        %579 = vmatprep.mubr.bf16.mxu0 0
        %580 = vmatmul.mubr.bf16.gmra.mxu0 %v508
        %v581 = vpop.f32.mrf.mxu0
        %v582 = vadd.f32 0.0, %v581
        %v583 = vpop.f32.mrf.mxu0
        %v584 = vpop.f32.mrf.mxu0
        %v585 = vadd.f32 0.0, %v584
        %v586 = vpop.f32.mrf.mxu0
        %587 = vmatprep.mubr.bf16.mxu0 0
        %588 = vmatmul.mubr.bf16.gmra.mxu0 %v509
        %v589 = vpop.f32.mrf.mxu0
        %v590 = vadd.f32 0.0, %v589
        %v591 = vpop.f32.mrf.mxu0
        %v592 = vpop.f32.mrf.mxu0
        %v593 = vadd.f32 0.0, %v592
        %v594 = vpop.f32.mrf.mxu0
        %595 = vmatprep.mubr.bf16.mxu0 0
        %596 = vmatmul.mubr.bf16.gmra.mxu0 %v510
        %v597 = vpop.f32.mrf.mxu0
        %v598 = vadd.f32 0.0, %v597
        %v599 = vpop.f32.mrf.mxu0
        %v600 = vpop.f32.mrf.mxu0
        %v601 = vadd.f32 0.0, %v600
        %v602 = vpop.f32.mrf.mxu0
        %603 = vmatprep.mubr.bf16.mxu0 0
        %604 = vmatmul.mubr.bf16.gmra.mxu0 %v511
        %v605 = vpop.f32.mrf.mxu0
        %v606 = vadd.f32 0.0, %v605
        %v607 = vpop.f32.mrf.mxu0
        %v608 = vpop.f32.mrf.mxu0
        %v609 = vadd.f32 0.0, %v608
        %v610 = vpop.f32.mrf.mxu0
        %611 = vmatprep.mubr.bf16.mxu0 0
        %612 = vmatmul.mubr.bf16.gmra.mxu0 %v512
        %v613 = vpop.f32.mrf.mxu0
        %v614 = vadd.f32 0.0, %v613
        %v615 = vpop.f32.mrf.mxu0
        %v616 = vpop.f32.mrf.mxu0
        %v617 = vadd.f32 0.0, %v616
        %v618 = vpop.f32.mrf.mxu0
        %619 = vmatprep.mubr.bf16.mxu0 0
        %620 = vmatmul.mubr.bf16.gmra.mxu0 %v513
        %v621 = vpop.f32.mrf.mxu0
        %v622 = vadd.f32 0.0, %v621
        %v623 = vpop.f32.mrf.mxu0
        %v624 = vpop.f32.mrf.mxu0
        %v625 = vadd.f32 0.0, %v624
        %v626 = vpop.f32.mrf.mxu0
        %627 = vdwg.mxu0
        %628 = vst [vmem:[%s372] sm:$0xff] %v558
        %629 = vst [vmem:[%s372 + $0x8] sm:$0xff] %v561
        %630 = vst [vmem:[%s372 + $0x10] sm:$0xff] %v566
        %631 = vst [vmem:[%s372 + $0x18] sm:$0xff] %v569
        %632 = vst [vmem:[%s372 + $0x20] sm:$0xff] %v574
        %633 = vst [vmem:[%s372 + $0x28] sm:$0xff] %v577
        %634 = vst [vmem:[%s372 + $0x30] sm:$0xff] %v582
        %635 = vst [vmem:[%s372 + $0x38] sm:$0xff] %v585
        %636 = vst [vmem:[%s372 + $0x40] sm:$0xff] %v590
        %637 = vst [vmem:[%s380] sm:$0xff] %v593
        %638 = vst [vmem:[%s380 + $0x8] sm:$0xff] %v598
        %639 = vst [vmem:[%s380 + $0x10] sm:$0xff] %v601
        %640 = vst [vmem:[%s380 + $0x18] sm:$0xff] %v606
        %641 = vst [vmem:[%s380 + $0x20] sm:$0xff] %v609
        %642 = vst [vmem:[%s380 + $0x28] sm:$0xff] %v614
        %643 = vst [vmem:[%s380 + $0x30] sm:$0xff] %v617
        %644 = vst [vmem:[%s380 + $0x38] sm:$0xff] %v622
        %645 = vst [vmem:[%s380 + $0x40] sm:$0xff] %v625
        %p646 = scmp.lt.s32.totalorder %s20, 7
        %s647 = scalar_select %p646, %s20, 7
        %p648 = scmp.lt.s32.totalorder %s21, 0
        %s649 = scalar_select %p648, %s21, 0
        %s650 = smul.addr %s647, 9
        %s651 = sadd.s32 %s649, %s650
        %s652 = smul.addr %s651, 8
        %s653 = scalar_lea.vmem %s3, %s652
        %p654 = scmp.lt.s32.totalorder %s20, 7
        %s655 = scalar_select %p654, %s20, 7
        %p656 = scmp.lt.s32.totalorder %s21, 0
        %s657 = scalar_select %p656, %s21, 0
        %s658 = smul.addr %s655, 9
        %s659 = sadd.s32 %s657, %s658
        %s660 = smul.addr %s659, 8
        %s661 = scalar_lea.vmem %s4, %s660
        // Predicated region
        $region115: #{forward.1} parent=105 // pred_check
          %p662 = pneg %p127
        $region116: #{forward.1} parent=105 // pred_check_branch
          %664 = sbr.rel (%p662) target = $region118
        $region117: #{forward.1} parent=105 // pred_region
          _
        $region118: #{forward.1} parent=105 // pred_fallthru
          _
        // Predicated region
        $region119: #{forward.1} parent=105 // pred_check
          %p665 = pneg %p155
        $region120: #{forward.1} parent=105 // pred_check_branch
          %667 = sbr.rel (%p665) target = $region122
        $region121: #{forward.1} parent=105 // pred_region
          _
        $region122: #{forward.1} parent=105 // pred_fallthru
          _
      $region106: #{forward.1} parent=5 // pred_fallthru
        _
      %p668 = scmp.le.s32.totalorder 2, %s11
      // Predicated region
      $region123: #{forward.1} parent=5 // pred_check
        %p669 = pneg %p668
      $region124: #{forward.1} parent=5 // pred_check_branch
        %671 = sbr.rel (%p669) target = $region126
      $region125: #{forward.1} parent=5 // pred_region
        %s672 = ssub.s32 %s11, 2
        // Predicated region
        $region127: #{forward.1} parent=125 // pred_check
          %p673 = pneg %p133
        $region128: #{forward.1} parent=125 // pred_check_branch
          %675 = sbr.rel (%p673) target = $region130
        $region129: #{forward.1} parent=125 // pred_region
          %p676 = scmp.lt.s32.totalorder %s22, 7
          %s677 = scalar_select %p676, %s22, 7
          %p678 = scmp.lt.s32.totalorder %s23, 0
          %s679 = scalar_select %p678, %s23, 0
          %s680 = smul.addr %s677, 9
          %s681 = sadd.s32 %s679, %s680
          %s682 = smul.addr %s681, 8
          %s683 = scalar_lea.vmem %s3, %s682
        $region130: #{forward.1} parent=125 // pred_fallthru
          _
        // Predicated region
        $region131: #{forward.1} parent=125 // pred_check
          %p684 = pneg %p161
        $region132: #{forward.1} parent=125 // pred_check_branch
          %686 = sbr.rel (%p684) target = $region134
        $region133: #{forward.1} parent=125 // pred_region
          %p687 = scmp.lt.s32.totalorder %s22, 7
          %s688 = scalar_select %p687, %s22, 7
          %p689 = scmp.lt.s32.totalorder %s23, 0
          %s690 = scalar_select %p689, %s23, 0
          %s691 = smul.addr %s688, 9
          %s692 = sadd.s32 %s690, %s691
          %s693 = smul.addr %s692, 8
          %s694 = scalar_lea.vmem %s4, %s693
        $region134: #{forward.1} parent=125 // pred_fallthru
          _
      $region126: #{forward.1} parent=5 // pred_fallthru
        _
    $region6: #{forward.1} parent=1 // loop_footer
      %s15 = sadd.s32 1, %s11
    $region7: #{forward.1} parent=1 // loop_footer_branch
      %10 = sbr.rel target = $region3
    $region8: #{forward.1} parent=1 // loop_exit
      _

</llo_original>
